<compile_context>
chip_gen: v5e
topology: v5e:2x2
jax: 0.10.0
libtpu: 0.0.40
codegen_flags: <defaults>
</compile_context>

<pallas_src>
import math
from functools import partial

import jax
import jax.numpy as jnp
from jax.experimental import pallas as pl
from jax.experimental.pallas import tpu as pltpu


def make_fixed_embedding_weight(c_in: int, d_model: int) -> jnp.ndarray:
    """Deterministic sinusoidal table, identical to the PyTorch __init__."""
    assert d_model % 2 == 0, "FixedEmbedding assumes an even d_model (as in the PyTorch original)"
    position = jnp.arange(c_in, dtype=jnp.float32)[:, None]              # (c_in, 1)
    div_term = jnp.exp(
        jnp.arange(0, d_model, 2, dtype=jnp.float32) * -(math.log(10000.0) / d_model)
    )                                                                     # (d_model/2,)
    w = jnp.zeros((c_in, d_model), dtype=jnp.float32)
    w = w.at[:, 0::2].set(jnp.sin(position * div_term))
    w = w.at[:, 1::2].set(jnp.cos(position * div_term))
    return w


def _round_up(n: int, m: int) -> int:
    return ((n + m - 1) // m) * m


def _fixed_emb_kernel(idx_ref, w_ref, out_ref):
    # idx_ref : (tile_n, 1) int32       token indices for this tile (pre-clamped to [0, c_in))
    # w_ref   : (c_in, d_model) f32     full table, resident in VMEM (constant index_map)
    # out_ref : (tile_n, d_model) f32
    tile_n = out_ref.shape[0]
    c_in = w_ref.shape[0]

    idx = idx_ref[...]                                                    # (tile_n, 1)
    # One-hot built once per tile: a single VALU compare against a lane iota.
    lane_ids = jax.lax.broadcasted_iota(jnp.int32, (tile_n, c_in), 1)     # (tile_n, c_in)
    onehot = (idx == lane_ids).astype(jnp.float32)                        # (tile_n, c_in)

    # Gather as an MXU matmul. f32 x f32 with an exact 0/1 left operand reproduces the
    # row gather bit-exactly; the underfilled matmul hides under the output DMA.
    out_ref[...] = jnp.dot(
        onehot, w_ref[...], preferred_element_type=jnp.float32
    ).astype(out_ref.dtype)


def fixed_embedding(x: jnp.ndarray, weight: jnp.ndarray, *, tile_n: int = 2048) -> jnp.ndarray:
    """Pallas-backed forward of FixedEmbedding: weight[x] with stop_gradient."""
    B, L = x.shape
    c_in, d_model = weight.shape
    N = B * L

    # Flatten tokens; clamp like jnp.take so out-of-range indices cannot silently
    # produce zero rows (PyTorch nn.Embedding would raise on them).
    idx = jnp.clip(x.reshape(N, 1).astype(jnp.int32), 0, c_in - 1)

    # Token tiling:
    #  - second-minor block dim must be a multiple of 8,
    #  - clamp so we get >= 2 grid steps whenever N allows it (megacore sharding on v7x),
    #  - no padding of N: the last block may be ragged; Pallas masks its OOB stores.
    half = _round_up(max(pl.cdiv(N, 2), 8), 8)
    tile_n = max(8, min(_round_up(tile_n, 8), half))
    num_tiles = pl.cdiv(N, tile_n)

    bytes_accessed = N * 4 + c_in * d_model * 4 + N * d_model * 4
    cost = pl.CostEstimate(
        flops=2 * N * c_in * d_model + N * c_in,   # one-hot matmul + the compare
        transcendentals=0,
        bytes_accessed=bytes_accessed,
    )

    out = pl.pallas_call(
        _fixed_emb_kernel,
        out_shape=jax.ShapeDtypeStruct((N, d_model), weight.dtype),
        grid=(num_tiles,),
        in_specs=[
            # Index stream: tiny HBM traffic (4 B/token). Lane padding only affects a
            # small double-buffered VMEM block (accounted for in the tile_n budget).
            pl.BlockSpec((tile_n, 1), lambda i: (i, 0)),
            # Full table with a constant block index -> DMA'd once, stays resident.
            pl.BlockSpec((c_in, d_model), lambda i: (0, 0)),
        ],
        out_specs=pl.BlockSpec((tile_n, d_model), lambda i: (i, 0)),
        compiler_params=pltpu.CompilerParams(
            dimension_semantics=("parallel",),          # shard token tiles across TCs (v7x)
            # Budget at tile_n=2048, d_model=512: 2x4 MiB out + 2x1 MiB idx + table ~10 MiB.
            vmem_limit_bytes=32 * 1024 * 1024,
        ),
        cost_estimate=cost,
    )(idx, weight)

    out = out.reshape(B, L, d_model)
    # .detach() in PyTorch -> stop_gradient here (table is non-trainable anyway).
    return jax.lax.stop_gradient(out)


if __name__ == "__main__":
    c_in, d_model = 16, 32       # small fixed "position-like" vocabulary
    B, L = 2, 8

    weight = make_fixed_embedding_weight(c_in, d_model)

    key = jax.random.PRNGKey(0)
    x = jax.random.randint(key, (B, L), 0, c_in, dtype=jnp.int32)

    # Default tile_n is clamped so this tiny demo still runs a 2-step, pipelined grid.
    out = fixed_embedding(x, weight)
    out = jax.block_until_ready(out)

    # Reference check (pure JAX gather).
    ref = jnp.take(weight, x, axis=0)
    assert out.shape == (B, L, d_model), out.shape
    assert jnp.allclose(out, ref, atol=1e-6), "mismatch vs reference gather"

    print("KERNEL_OK")
</pallas_src>

<mosaic_0001>
module attributes {stable_mosaic.version = 11 : i64} {
  func.func @_fixed_emb_kernel(%arg0: i32, %arg1: memref<8x1xi32, #tpu.memory_space<vmem>>, %arg2: memref<16x32xf32, #tpu.memory_space<vmem>>, %arg3: memref<8x32xf32, #tpu.memory_space<vmem>>) attributes {dimension_semantics = [#tpu.dimension_semantics<parallel>], iteration_bounds = array<i64: 2>, scalar_prefetch = 0 : i64, scratch_operands = 0 : i64, tpu.core_type = #tpu.core_type<tc>, window_params = [{transform_indices = @transform_0, window_bounds = array<i64: 8, 1>}, {pipeline_mode = #tpu.pipeline_mode<synchronous>, transform_indices = @transform_1, window_bounds = array<i64: 16, 32>}, {transform_indices = @transform_2, window_bounds = array<i64: 8, 32>}]} {
    %c0 = arith.constant 0 : index
    %c0_0 = arith.constant 0 : index
    %0 = vector.load %arg1[%c0, %c0_0] : memref<8x1xi32, #tpu.memory_space<vmem>>, vector<8x1xi32>
    %1 = tpu.iota {dimensions = array<i32: 1>} : vector<8x16xi32>
    %2 = vector.broadcast %0 : vector<8x1xi32> to vector<8x16xi32>
    %3 = arith.cmpi eq, %2, %1 : vector<8x16xi32>
    %4 = arith.extui %3 : vector<8x16xi1> to vector<8x16xi32>
    %5 = arith.sitofp %4 : vector<8x16xi32> to vector<8x16xf32>
    %c0_1 = arith.constant 0 : index
    %c0_2 = arith.constant 0 : index
    %6 = vector.load %arg2[%c0_1, %c0_2] : memref<16x32xf32, #tpu.memory_space<vmem>>, vector<16x32xf32>
    %cst = arith.constant dense<0.000000e+00> : vector<8x32xf32>
    %7 = tpu.matmul %5, %6, %cst {dimension_numbers = #tpu.dot_dimension_numbers<[1], [0], [0], [1], [0, 0, 1, 1], [], []>} : vector<8x16xf32>, vector<16x32xf32>, vector<8x32xf32> -> vector<8x32xf32>
    %c0_3 = arith.constant 0 : index
    %c0_4 = arith.constant 0 : index
    %8 = vector.load %arg3[%c0_3, %c0_4] : memref<8x32xf32, #tpu.memory_space<vmem>>, vector<8x32xf32>
    tpu.vector_store %arg3[%c0_3, %c0_4], %7 {strides = array<i32>} : memref<8x32xf32, #tpu.memory_space<vmem>>, vector<8x32xf32>,
    return
  }
  func.func @transform_0(%arg0: i32) -> (i32, i32) {
    %c0_i32 = arith.constant 0 : i32
    %c0_i32_0 = arith.constant 0 : i32
    return %arg0, %c0_i32 : i32, i32
  }
  func.func @transform_1(%arg0: i32) -> (i32, i32) {
    %c0_i32 = arith.constant 0 : i32
    %c0_i32_0 = arith.constant 0 : i32
    %c0_i32_1 = arith.constant 0 : i32
    return %c0_i32, %c0_i32_0 : i32, i32
  }
  func.func @transform_2(%arg0: i32) -> (i32, i32) {
    %c0_i32 = arith.constant 0 : i32
    %c0_i32_0 = arith.constant 0 : i32
    return %arg0, %c0_i32 : i32, i32
  }
}

</mosaic_0001>

<llo_original>
// kernel: tpu_custom_call.1
$region0: #{tpu_custom_call.1}
  #allocation0 [shape = 'u32[]', space=smem, size = 0x4, offset = 0x4, fixed_abs, tag = 'smem constant byte address 0x4 - core index']
  #allocation1 [shape = 'u32[72,128]{1,0:T(1,128)}', space=vmem, size = 0x9000, scoped, tag = 'internal scratch']
  %s0 = inlined_call_operand.vmem [shape: s32[16,1], index: 0, kind: input, shape index: {}]
  %s1 = inlined_call_operand.vmem [shape: f32[16,32], index: 1, kind: input, shape index: {}]
  %s2 = inlined_call_operand.hbm [shape: f32[16,32], index: 2, kind: output, shape index: {}]
  %s3 = sld [smem:[#allocation0]]
  $region41: #{tpu_custom_call.1} parent=0
    _
  %s5 = ssub.s32 1, %s3
  %s6 = scalar_select 0, %s5, %s3
  $region1: #{tpu_custom_call.1} parent=0
    #allocation2 [shape = 'u8[8192]{0}', space=vmem, size = 0x2000, scoped, tag = 'output window, operand 0']
    #allocation3 [shape = 's32[2]{0}', space=sflag, size = 0x8, scoped, tag = 'scoped memory for tpu_custom_call.1']
    %7 = vsyncpa [#allocation3], 0
    %s8 = scalar_lea.sflag [#allocation3], 1
    %9 = vsyncpa %s8, 0
    loop: start=0, step=1, limit=4
    $region2: #{tpu_custom_call.1} parent=1 // loop_pre_header
      _
    $region3: #{tpu_custom_call.1} parent=1 // loop_header
      %s11 = sphi 0, %s15
      %p12 = scmp.ge.s32.totalorder %s11, 4
      %s21 = sphi 0, %s23
      %s24 = sphi 0, %s21
      %s25 = sphi 0, %s24
      %s41 = sphi 0, %s25
      %s45 = sphi 0, %s45
      %s47 = sphi 0, %s45
      %s48 = sphi 0, %s47
      %s62 = sphi 0, %s48
      %s68 = sphi 0, %s70
      %s71 = sphi 0, %s68
      %s72 = sphi 0, %s71
      %s88 = sphi 0, %s72
    $region4: #{tpu_custom_call.1} parent=1 // loop_header_branch
      %14 = sbr.rel (%p12) target = $region8
    $region5: #{tpu_custom_call.1} parent=1 // loop_body
      %s16 = ssub.s32 %s11, 1
      %s17 = ssub.s32 %s11, 2
      %s18 = sadd.s32 %s11, 1
      %s19 = ssub.s32 %s11, %s18
      %p20 = scmp.eq.s32.totalorder %s19, 0
      %s22 = sadd.s32 %s21, 1
      %s23 = scalar_select %p20, %s21, %s22
      %p26 = pneg %p20
      %p27 = scmp.eq.s32.totalorder %s11, 1
      %p28 = por %p26, %p27
      %p29 = scmp.ne.s32.totalorder %s21, %s24
      %p30 = scmp.eq.s32.totalorder %s11, 0
      %p31 = por %p29, %p30
      %p32 = scmp.ne.s32.totalorder %s21, %s24
      %p33 = scmp.eq.s32.totalorder %s16, 1
      %p34 = por %p32, %p33
      %p35 = scmp.ne.s32.totalorder %s24, %s25
      %p36 = scmp.eq.s32.totalorder %s16, 0
      %p37 = por %p35, %p36
      %p38 = scmp.ne.s32.totalorder %s24, %s25
      %p39 = scmp.eq.s32.totalorder %s17, 1
      %p40 = por %p38, %p39
      %p42 = scmp.ne.s32.totalorder %s25, %s41
      %p43 = scmp.eq.s32.totalorder %s17, 0
      %p44 = por %p42, %p43
      %s46 = sadd.s32 %s45, 1
      %p49 = scmp.eq.s32.totalorder %s11, 1
      %p50 = scmp.ne.s32.totalorder %s45, %s47
      %p51 = scmp.eq.s32.totalorder %s11, 0
      %p52 = por %p50, %p51
      %p53 = scmp.ne.s32.totalorder %s45, %s47
      %p54 = scmp.eq.s32.totalorder %s16, 1
      %p55 = por %p53, %p54
      %p56 = scmp.ne.s32.totalorder %s47, %s48
      %p57 = scmp.eq.s32.totalorder %s16, 0
      %p58 = por %p56, %p57
      %p59 = scmp.ne.s32.totalorder %s47, %s48
      %p60 = scmp.eq.s32.totalorder %s17, 1
      %p61 = por %p59, %p60
      %p63 = scmp.ne.s32.totalorder %s48, %s62
      %p64 = scmp.eq.s32.totalorder %s17, 0
      %p65 = por %p63, %p64
      %s66 = ssub.s32 %s11, %s18
      %p67 = scmp.eq.s32.totalorder %s66, 0
      %s69 = sadd.s32 %s68, 1
      %s70 = scalar_select %p67, %s68, %s69
      %p73 = pneg %p67
      %p74 = scmp.eq.s32.totalorder %s11, 1
      %p75 = por %p73, %p74
      %p76 = scmp.ne.s32.totalorder %s68, %s71
      %p77 = scmp.eq.s32.totalorder %s11, 0
      %p78 = por %p76, %p77
      %p79 = scmp.ne.s32.totalorder %s68, %s71
      %p80 = scmp.eq.s32.totalorder %s16, 1
      %p81 = por %p79, %p80
      %p82 = scmp.ne.s32.totalorder %s71, %s72
      %p83 = scmp.eq.s32.totalorder %s16, 0
      %p84 = por %p82, %p83
      %p85 = scmp.ne.s32.totalorder %s71, %s72
      %p86 = scmp.eq.s32.totalorder %s17, 1
      %p87 = por %p85, %p86
      %p89 = scmp.ne.s32.totalorder %s72, %s88
      %p90 = scmp.eq.s32.totalorder %s17, 0
      %p91 = por %p89, %p90
      %p92 = scmp.le.s32.totalorder 1, %s11
      %p93 = scmp.lt.s32.totalorder %s11, 3
      %p94 = pnand %p92, %p93
      %p95 = pneg %p94
      // Predicated region
      $region9: #{tpu_custom_call.1} parent=5 // pred_check
        _
      $region10: #{tpu_custom_call.1} parent=5 // pred_check_branch
        %97 = sbr.rel (%p94) target = $region12
      $region11: #{tpu_custom_call.1} parent=5 // pred_region
        %s98 = ssub.s32 %s11, 1
        // Predicated region
        $region13: #{tpu_custom_call.1} parent=11 // pred_check
          %p99 = pneg %p58
        $region14: #{tpu_custom_call.1} parent=11 // pred_check_branch
          %101 = sbr.rel (%p99) target = $region16
        $region15: #{tpu_custom_call.1} parent=11 // pred_region
          _
        $region16: #{tpu_custom_call.1} parent=11 // pred_fallthru
          _
      $region12: #{tpu_custom_call.1} parent=5 // pred_fallthru
        _
      %p102 = scmp.lt.s32.totalorder %s11, 2
      // Predicated region
      $region17: #{tpu_custom_call.1} parent=5 // pred_check
        %p103 = pneg %p102
      $region18: #{tpu_custom_call.1} parent=5 // pred_check_branch
        %105 = sbr.rel (%p103) target = $region20
      $region19: #{tpu_custom_call.1} parent=5 // pred_region
        // Predicated region
        $region21: #{tpu_custom_call.1} parent=19 // pred_check
          %p106 = pneg %p31
        $region22: #{tpu_custom_call.1} parent=19 // pred_check_branch
          %108 = sbr.rel (%p106) target = $region24
        $region23: #{tpu_custom_call.1} parent=19 // pred_region
          %p109 = scmp.lt.s32.totalorder %s11, 1
          %s110 = scalar_select %p109, %s11, 1
          %s111 = smul.addr %s110, 8
          %s112 = scalar_lea.vmem %s0, %s111
        $region24: #{tpu_custom_call.1} parent=19 // pred_fallthru
          _
      $region20: #{tpu_custom_call.1} parent=5 // pred_fallthru
        _
      %p113 = scmp.le.s32.totalorder 1, %s11
      %p114 = scmp.lt.s32.totalorder %s11, 3
      %p115 = pnand %p113, %p114
      %p116 = pneg %p115
      // Predicated region
      $region25: #{tpu_custom_call.1} parent=5 // pred_check
        _
      $region26: #{tpu_custom_call.1} parent=5 // pred_check_branch
        %118 = sbr.rel (%p115) target = $region28
      $region27: #{tpu_custom_call.1} parent=5 // pred_region
        %s119 = ssub.s32 %s11, 1
        %p120 = scmp.lt.s32.totalorder %s16, 1
        %s121 = scalar_select %p120, %s16, 1
        %s122 = smul.addr %s121, 8
        %s123 = scalar_lea.vmem %s0, %s122
        %p124 = pneg %p37
        %p125 = pneg %p34
        %p126 = pneg %p58
        %p127 = pneg %p55
        %p128 = pneg %p84
        %p129 = pneg %p81
        %s130 = sand.u32 %s71, 1
        %s131 = scalar_lea.sflag [#allocation3], %s130
        %s132 = sand.u32 %s71, 1
        %s133 = smul.addr %s132, 8
        %s134 = scalar_lea.vmem [#allocation2], %s133
        %p135 = scmp.lt.s32.totalorder %s16, 1
        %s136 = scalar_select %p135, %s16, 1
        %s137 = smul.addr %s136, 8
        %s138 = scalar_lea.vmem %s0, %s137
        %v139 = vld [vmem:[%s138] sm:$0xff]
        %v140 = vlaneseq
        %v141 = vand.u32 %v140, 127
        %142 = vset.pattern.permute.xlu0 0
        %143 = vperm.xlu0 %142, %v139
        %v144 = vpop.permute.xlu0 %143
        %vm145 = vcmp.eq.s32.totalorder %v144, %v141
        %v146 = vsel %vm145, 1, 0
        %v147 = vcvt.s32.f32 %v146
        %v148 = vld [vmem:[%s1] sm:$0xff]
        %v149 = vld [vmem:[%s1 + $0x8] sm:$0xff]
        %vm150 = vcmask 130048
        %v152 = vsel %vm150, %v147, 0
        %154 = vmatpush.msra.mxu0 0.0
        %155 = vmatpush.msra.mxu0 0.0
        %156 = vmatpush.msra.mxu0 0.0
        %157 = vmatpush.msra.mxu0 0.0
        %158 = vmatpush.msra.mxu0 0.0
        %159 = vmatpush.msra.mxu0 0.0
        %160 = vmatpush.msra.mxu0 0.0
        %161 = vmatpush.msra.mxu0 0.0
        %162 = vmatpush.msra.mxu0 0.0
        %163 = vmatpush.msra.mxu0 0.0
        %164 = vmatpush.msra.mxu0 0.0
        %165 = vmatpush.msra.mxu0 0.0
        %166 = vmatpush.msra.mxu0 0.0
        %167 = vmatpush.msra.mxu0 0.0
        %168 = vmatpush.msra.mxu0 %v149
        %169 = vmatpush.msra.mxu0 %v148
        %170 = vmatmul.f32.gmra.mxu0 %v152
        %v171 = vpop.f32.mrf.mxu0
        %v172 = vadd.f32 0.0, %v171
        %173 = vdwg.mxu0
        %vm174 = vcmask 261120
        %175 = vst.msk [vmem:[%s134] sm:$0xff] %vm174, %v172
        %s176 = sand.u32 %s71, 1
        %s177 = scalar_lea.sflag [#allocation3], %s176
        %s178 = sand.u32 %s71, 1
        %s179 = smul.addr %s178, 8
        %s180 = scalar_lea.vmem [#allocation2], %s179
        // Predicated region
        $region29: #{tpu_custom_call.1} parent=27 // pred_check
          %p181 = pneg %p81
        $region30: #{tpu_custom_call.1} parent=27 // pred_check_branch
          %183 = sbr.rel (%p181) target = $region32
        $region31: #{tpu_custom_call.1} parent=27 // pred_region
          %185 = vsyncadd %s177, 0
          %s186 = smul.addr %s16, 8
          %s187 = scalar_lea.hbm %s2, %s186
          %s189 = sshll.u32 %s180, 4
          %s190 = int_to_ptr.vmem [resolvable:$true] %s189
          %s191 = sshll.u32 %s187, 4
          %s192 = int_to_ptr.hbm [resolvable:$true] %s191
          %194 = dma.vmem_to_hbm [thread:$0]  %s190, 128, %s192, %s177
        $region32: #{tpu_custom_call.1} parent=27 // pred_fallthru
          _
      $region28: #{tpu_custom_call.1} parent=5 // pred_fallthru
        _
      %p195 = scmp.le.s32.totalorder 2, %s11
      // Predicated region
      $region33: #{tpu_custom_call.1} parent=5 // pred_check
        %p196 = pneg %p195
      $region34: #{tpu_custom_call.1} parent=5 // pred_check_branch
        %198 = sbr.rel (%p196) target = $region36
      $region35: #{tpu_custom_call.1} parent=5 // pred_region
        %s199 = ssub.s32 %s11, 2
        // Predicated region
        $region37: #{tpu_custom_call.1} parent=35 // pred_check
          %p200 = pneg %p87
        $region38: #{tpu_custom_call.1} parent=35 // pred_check_branch
          %202 = sbr.rel (%p200) target = $region40
        $region39: #{tpu_custom_call.1} parent=35 // pred_region
          %s203 = sand.u32 %s72, 1
          %s204 = scalar_lea.sflag [#allocation3], %s203
          %s205 = sand.u32 %s72, 1
          %s206 = smul.addr %s205, 8
          %s207 = scalar_lea.vmem [#allocation2], %s206
          %209 = dma.done %s204, 128
        $region40: #{tpu_custom_call.1} parent=35 // pred_fallthru
          _
      $region36: #{tpu_custom_call.1} parent=5 // pred_fallthru
        _
    $region6: #{tpu_custom_call.1} parent=1 // loop_footer
      %s15 = sadd.s32 1, %s11
    $region7: #{tpu_custom_call.1} parent=1 // loop_footer_branch
      %10 = sbr.rel target = $region3
    $region8: #{tpu_custom_call.1} parent=1 // loop_exit
      _
    %210 = vsyncpa [#allocation3], 1
    %s211 = scalar_lea.sflag [#allocation3], 1
    %212 = vsyncpa %s211, 1

</llo_original>
